<compile_context>
chip_gen: v6e
topology: v6e:2x2x1
jax: 0.10.0
libtpu: 0.0.40
codegen_flags: <defaults>
</compile_context>

<pallas_src>
import functools

import jax
import jax.numpy as jnp
from jax.experimental import pallas as pl
from jax.experimental.pallas import tpu as pltpu


def _round_up(x, m):
    return ((x + m - 1) // m) * m


def _sublane_multiple(dtype):
    # Native sublane packing: 8 rows for 4-byte, 16 for 2-byte, 32 for 1-byte.
    return {4: 8, 2: 16, 1: 32}.get(jnp.dtype(dtype).itemsize, 8)


def _linear_relu_kernel(x_ref, w_ref, b_ref, o_ref):
    # x_ref: [tm, K]   streamed activation row tile
    # w_ref: [K, N]    resident weight, canonical [d_model, d_predictor] layout
    # b_ref: [1, N]    resident bias (f32)
    # o_ref: [tm, N]
    y = jnp.dot(x_ref[...], w_ref[...], preferred_element_type=jnp.float32)
    y = y + b_ref[...]                      # f32 epilogue on the accumulator
    o_ref[...] = jnp.maximum(y, 0.0).astype(o_ref.dtype)


def predictor_forward(x, weight, bias, *, tm=1024, compute_dtype=jnp.bfloat16):
    """Equivalent of Predictor.forward.

    x:      (..., d_model)
    weight: (d_predictor, d_model)   -- PyTorch nn.Linear convention
    bias:   (d_predictor,)
    returns (..., d_predictor), same dtype as x.

    compute_dtype: dtype x / weight are cast to before the MXU (bf16 default,
                   halves input HBM traffic); accumulation is always f32.
                   Pass None for the exact f32 path.
    """
    d_pred, d_model = weight.shape
    lead = x.shape[:-1]
    out_dtype = x.dtype

    x2d = x.reshape(-1, d_model)
    m = x2d.shape[0]

    if compute_dtype is not None:
        x2d = x2d.astype(compute_dtype)
        weight = weight.astype(compute_dtype)

    # One-time XLA transpose to canonical [K, N]; weight stays resident so the
    # transpose cost is amortized over the whole grid.  Bias kept in f32.
    w_t = weight.T                                      # [d_model, d_pred]
    b2d = bias.astype(jnp.float32).reshape(1, d_pred)   # [1, d_pred]

    x_item = jnp.dtype(x2d.dtype).itemsize
    w_item = jnp.dtype(w_t.dtype).itemsize
    o_item = jnp.dtype(out_dtype).itemsize

    # ---- generation-aware VMEM budget and row-tile size ---------------------
    try:
        info = pltpu.get_tpu_info()
        vmem_cap = int(getattr(info, "vmem_capacity_bytes", 64 * 1024 * 1024))
    except Exception:
        vmem_cap = 64 * 1024 * 1024            # conservative (v7x per-TC)
    # v5e/v6e (128 MiB) -> 96 MiB limit; v7x (64 MiB) -> 48 MiB limit.
    vmem_limit = min((vmem_cap * 3) // 4, 100 * 1024 * 1024)

    sub = _sublane_multiple(x2d.dtype)
    resident = d_model * d_pred * w_item + d_pred * 4            # W + bias
    per_row = 2 * d_model * x_item + 2 * d_pred * o_item         # 2x-buffered x/out
    avail = max(vmem_limit // 2 - resident, per_row * 4 * sub)   # headroom
    tm_cap = max(sub, ((avail // per_row) // sub) * sub)

    tm_eff = min(tm, tm_cap, _round_up(m, sub))
    # Keep >= 4 grid steps when m allows, so megacore sharding (v7x) engages.
    if m >= 8 * sub:
        tm_eff = min(tm_eff, _round_up(pl.cdiv(m, 4), sub))
    tm_eff = max(sub, _round_up(tm_eff, sub))

    grid = (pl.cdiv(m, tm_eff),)

    # Advisory cost (true, unpadded sizes).
    bytes_accessed = int(
        m * d_model * x_item
        + d_model * d_pred * w_item
        + d_pred * 4
        + m * d_pred * o_item
    )
    cost = pl.CostEstimate(
        flops=2 * m * d_model * d_pred,
        transcendentals=0,
        bytes_accessed=bytes_accessed,
    )

    out = pl.pallas_call(
        _linear_relu_kernel,
        out_shape=jax.ShapeDtypeStruct((m, d_pred), out_dtype),
        grid=grid,
        in_specs=[
            pl.BlockSpec((tm_eff, d_model), lambda i: (i, 0)),   # streamed x rows
            pl.BlockSpec((d_model, d_pred), lambda i: (0, 0)),   # resident W [K,N]
            pl.BlockSpec((1, d_pred), lambda i: (0, 0)),         # resident bias
        ],
        out_specs=pl.BlockSpec((tm_eff, d_pred), lambda i: (i, 0)),
        compiler_params=pltpu.CompilerParams(
            dimension_semantics=("parallel",),   # megacore sharding on v7x
            vmem_limit_bytes=int(vmem_limit),
        ),
        cost_estimate=cost,
    )(x2d, w_t, b2d)

    return out.reshape(*lead, d_pred)


if __name__ == "__main__":
    # Small shapes implied by the module: batch=2, seq=8, d_model=32, d_predictor=64
    batch, seq, d_model, d_predictor = 2, 8, 32, 64

    key = jax.random.PRNGKey(0)
    kx, kw, kb = jax.random.split(key, 3)

    x = jax.random.normal(kx, (batch, seq, d_model), dtype=jnp.float32)
    bound = 1.0 / jnp.sqrt(d_model)
    weight = jax.random.uniform(kw, (d_predictor, d_model),
                                minval=-bound, maxval=bound, dtype=jnp.float32)
    bias = jax.random.uniform(kb, (d_predictor,),
                              minval=-bound, maxval=bound, dtype=jnp.float32)

    # Plain-JAX reference of the same math.
    ref = jnp.maximum(x @ weight.T + bias, 0.0)

    # Exact f32 path.
    fwd_f32 = jax.jit(functools.partial(predictor_forward, compute_dtype=None))
    out_f32 = jax.block_until_ready(fwd_f32(x, weight, bias))
    assert out_f32.shape == (batch, seq, d_predictor)
    assert out_f32.dtype == x.dtype
    assert jnp.allclose(out_f32, ref, atol=1e-5, rtol=1e-5)

    # Default bf16-input path (f32 accumulation) -- bandwidth-optimal.
    fwd_bf16 = jax.jit(predictor_forward)
    out_bf16 = jax.block_until_ready(fwd_bf16(x, weight, bias))
    assert out_bf16.shape == (batch, seq, d_predictor)
    assert out_bf16.dtype == x.dtype
    assert jnp.allclose(out_bf16, ref, atol=3e-2, rtol=3e-2)

    print("KERNEL_OK")
</pallas_src>

<mosaic_0001>
module attributes {stable_mosaic.version = 11 : i64} {
  func.func @_linear_relu_kernel(%arg0: i32, %arg1: memref<16x32xf32, #tpu.memory_space<vmem>>, %arg2: memref<32x64xf32, #tpu.memory_space<vmem>>, %arg3: memref<1x64xf32, #tpu.memory_space<vmem>>, %arg4: memref<16x64xf32, #tpu.memory_space<vmem>>) attributes {dimension_semantics = [#tpu.dimension_semantics<parallel>], iteration_bounds = array<i64: 1>, scalar_prefetch = 0 : i64, scratch_operands = 0 : i64, tpu.core_type = #tpu.core_type<tc>, window_params = [{transform_indices = @transform_0, window_bounds = array<i64: 16, 32>}, {pipeline_mode = #tpu.pipeline_mode<synchronous>, transform_indices = @transform_1, window_bounds = array<i64: 32, 64>}, {pipeline_mode = #tpu.pipeline_mode<synchronous>, transform_indices = @transform_2, window_bounds = array<i64: 1, 64>}, {transform_indices = @transform_3, window_bounds = array<i64: 16, 64>}]} {
    %c0 = arith.constant 0 : index
    %c0_0 = arith.constant 0 : index
    %0 = vector.load %arg1[%c0, %c0_0] : memref<16x32xf32, #tpu.memory_space<vmem>>, vector<16x32xf32>
    %c0_1 = arith.constant 0 : index
    %c0_2 = arith.constant 0 : index
    %1 = vector.load %arg2[%c0_1, %c0_2] : memref<32x64xf32, #tpu.memory_space<vmem>>, vector<32x64xf32>
    %cst = arith.constant dense<0.000000e+00> : vector<16x64xf32>
    %2 = tpu.matmul %0, %1, %cst {dimension_numbers = #tpu.dot_dimension_numbers<[1], [0], [0], [1], [0, 0, 1, 1], [], []>} : vector<16x32xf32>, vector<32x64xf32>, vector<16x64xf32> -> vector<16x64xf32>
    %c0_3 = arith.constant 0 : index
    %c0_4 = arith.constant 0 : index
    %3 = vector.load %arg3[%c0_3, %c0_4] : memref<1x64xf32, #tpu.memory_space<vmem>>, vector<1x64xf32>
    %4 = vector.broadcast %3 : vector<1x64xf32> to vector<16x64xf32>
    %5 = arith.addf %2, %4 : vector<16x64xf32>
    %cst_5 = arith.constant 0.000000e+00 : f32
    %6 = vector.broadcast %cst_5 : f32 to vector<16x64xf32>
    %7 = arith.maximumf %5, %6 : vector<16x64xf32>
    %c0_6 = arith.constant 0 : index
    %c0_7 = arith.constant 0 : index
    %8 = vector.load %arg4[%c0_6, %c0_7] : memref<16x64xf32, #tpu.memory_space<vmem>>, vector<16x64xf32>
    tpu.vector_store %arg4[%c0_6, %c0_7], %7 {strides = array<i32>} : memref<16x64xf32, #tpu.memory_space<vmem>>, vector<16x64xf32>,
    return
  }
  func.func @transform_0(%arg0: i32) -> (i32, i32) {
    %c0_i32 = arith.constant 0 : i32
    %c0_i32_0 = arith.constant 0 : i32
    return %arg0, %c0_i32 : i32, i32
  }
  func.func @transform_1(%arg0: i32) -> (i32, i32) {
    %c0_i32 = arith.constant 0 : i32
    %c0_i32_0 = arith.constant 0 : i32
    %c0_i32_1 = arith.constant 0 : i32
    return %c0_i32, %c0_i32_0 : i32, i32
  }
  func.func @transform_2(%arg0: i32) -> (i32, i32) {
    %c0_i32 = arith.constant 0 : i32
    %c0_i32_0 = arith.constant 0 : i32
    %c0_i32_1 = arith.constant 0 : i32
    return %c0_i32, %c0_i32_0 : i32, i32
  }
  func.func @transform_3(%arg0: i32) -> (i32, i32) {
    %c0_i32 = arith.constant 0 : i32
    %c0_i32_0 = arith.constant 0 : i32
    return %arg0, %c0_i32 : i32, i32
  }
}

</mosaic_0001>

<llo_original>
// kernel: predictor_forward.1
$region0: #{predictor_forward.1}
  #allocation0 [shape = 'u32[]', space=smem, size = 0x4, offset = 0x4, fixed_abs, tag = 'smem constant byte address 0x4 - core index']
  #allocation1 [shape = 'u32[144,128]{1,0:T(1,128)}', space=vmem, size = 0x12000, scoped, tag = 'internal scratch']
  %s0 = inlined_call_operand.hbm [shape: f32[16,32], index: 0, kind: input, shape index: {}]
  %s1 = inlined_call_operand.hbm [shape: f32[32,64], index: 1, kind: input, shape index: {}]
  %s2 = inlined_call_operand.vmem [shape: f32[1,64], index: 2, kind: input, shape index: {}]
  %s3 = inlined_call_operand.hbm [shape: f32[16,64], index: 3, kind: output, shape index: {}]
  %s4 = sld [smem:[#allocation0]]
  $region30: #{predictor_forward.1} parent=0
    _
  %s6 = ssub.s32 1, %s4
  %s7 = scalar_select 0, %s6, %s4
  $region1: #{predictor_forward.1} parent=0
    #allocation2 [shape = 'u8[8192]{0}', space=vmem, size = 0x2000, scoped, tag = 'input window, operand 0, single buffered']
    #allocation3 [shape = 's32[1]{0}', space=sflag, size = 0x4, scoped, tag = 'scoped memory for predictor_forward.1']
    #allocation4 [shape = 's32[1]{0}', space=sflag, size = 0x4, scoped, tag = 'scoped memory for predictor_forward.1']
    #allocation5 [shape = 'u8[16384]{0}', space=vmem, size = 0x4000, scoped, tag = 'input window, operand 1, single buffered']
    #allocation6 [shape = 's32[1]{0}', space=sflag, size = 0x4, scoped, tag = 'scoped memory for predictor_forward.1']
    #allocation7 [shape = 'u8[8192]{0}', space=vmem, size = 0x2000, scoped, tag = 'output window, operand 0, single buffered']
    %8 = vsyncpa [#allocation3], 0
    %9 = vsyncpa [#allocation6], 0
    %10 = vsyncpa [#allocation4], 0
    // Predicated region
    $region2: #{predictor_forward.1} parent=1 // pred_check
      _
    $region3: #{predictor_forward.1} parent=1 // pred_check_branch
      %12 = sbr.rel (0) target = $region5
    $region4: #{predictor_forward.1} parent=1 // pred_region
      %s14 = ssub.s32 256, 256
      %15 = vsyncadd [#allocation3], %s14
      %s16 = sshll.u32 [#allocation2], 4
      %s17 = int_to_ptr.vmem [resolvable:$true] %s16
      %22 = dma.hbm_to_vmem [thread:$0]  %s0, 256, %s17, [#allocation3], 128, 128, 8
    $region5: #{predictor_forward.1} parent=1 // pred_fallthru
      _
    // Predicated region
    $region6: #{predictor_forward.1} parent=1 // pred_check
      _
    $region7: #{predictor_forward.1} parent=1 // pred_check_branch
      %24 = sbr.rel (0) target = $region9
    $region8: #{predictor_forward.1} parent=1 // pred_region
      %s26 = ssub.s32 512, 512
      %27 = vsyncadd [#allocation6], %s26
      %s28 = sshll.u32 [#allocation5], 4
      %s29 = int_to_ptr.vmem [resolvable:$true] %s28
      %34 = dma.hbm_to_vmem [thread:$0]  %s1, 512, %s29, [#allocation6], 128, 128, 8
    $region9: #{predictor_forward.1} parent=1 // pred_fallthru
      _
    // Predicated region
    $region10: #{predictor_forward.1} parent=1 // pred_check
      _
    $region11: #{predictor_forward.1} parent=1 // pred_check_branch
      %36 = sbr.rel (0) target = $region13
    $region12: #{predictor_forward.1} parent=1 // pred_region
      _
    $region13: #{predictor_forward.1} parent=1 // pred_fallthru
      _
    // Predicated region
    $region14: #{predictor_forward.1} parent=1 // pred_check
      _
    $region15: #{predictor_forward.1} parent=1 // pred_check_branch
      %38 = sbr.rel (0) target = $region17
    $region16: #{predictor_forward.1} parent=1 // pred_region
      %39 = dma.done [#allocation3], 256
    $region17: #{predictor_forward.1} parent=1 // pred_fallthru
      _
    // Predicated region
    $region18: #{predictor_forward.1} parent=1 // pred_check
      _
    $region19: #{predictor_forward.1} parent=1 // pred_check_branch
      %41 = sbr.rel (0) target = $region21
    $region20: #{predictor_forward.1} parent=1 // pred_region
      %42 = dma.done [#allocation6], 512
    $region21: #{predictor_forward.1} parent=1 // pred_fallthru
      _
    %v43 = vld [vmem:[#allocation2] sm:$0xff]
    %v44 = vld [vmem:[#allocation2 + $0x8] sm:$0xff]
    %v45 = vld [vmem:[#allocation5] sm:$0xff]
    %v46 = vld [vmem:[#allocation5 + $0x8] sm:$0xff]
    %v47 = vld [vmem:[#allocation5 + $0x10] sm:$0xff]
    %v48 = vld [vmem:[#allocation5 + $0x18] sm:$0xff]
    %v49 = vld [vmem:[%s2] sm:$0x1]
    %v51 = vlaneseq
    %v52 = vshrl.u32 %v51, 7
    %v53 = vsub.s32 0, %v52
    %v54 = vrot.slane %v49, %v53
    %vm56 = vcmask 261120
    %v58 = vsel %vm56, %v43, 0
    %v61 = vsel %vm56, %v44, 0
    %63 = vmatprep.subr.mxu0 0.0
    %64 = vmatpush1.msra.mxu0 0.0
    %65 = vmatprep.subr.mxu0 0.0
    %66 = vmatpush1.msra.mxu0 0.0
    %67 = vmatprep.subr.mxu0 0.0
    %68 = vmatpush1.msra.mxu0 0.0
    %69 = vmatprep.subr.mxu0 0.0
    %70 = vmatpush1.msra.mxu0 0.0
    %71 = vmatprep.subr.mxu0 0.0
    %72 = vmatpush1.msra.mxu0 0.0
    %73 = vmatprep.subr.mxu0 0.0
    %74 = vmatpush1.msra.mxu0 0.0
    %75 = vmatprep.subr.mxu0 0.0
    %76 = vmatpush1.msra.mxu0 0.0
    %77 = vmatprep.subr.mxu0 0.0
    %78 = vmatpush1.msra.mxu0 0.0
    %79 = vmatprep.subr.mxu0 0.0
    %80 = vmatpush1.msra.mxu0 0.0
    %81 = vmatprep.subr.mxu0 0.0
    %82 = vmatpush1.msra.mxu0 0.0
    %83 = vmatprep.subr.mxu0 0.0
    %84 = vmatpush1.msra.mxu0 0.0
    %85 = vmatprep.subr.mxu0 0.0
    %86 = vmatpush1.msra.mxu0 0.0
    %87 = vmatprep.subr.mxu0 0.0
    %88 = vmatpush1.msra.mxu0 %v48
    %89 = vmatprep.subr.mxu0 0.0
    %90 = vmatpush1.msra.mxu0 %v47
    %91 = vmatprep.subr.mxu0 0.0
    %92 = vmatpush1.msra.mxu0 %v46
    %93 = vmatprep.subr.mxu0 0.0
    %94 = vmatpush1.msra.mxu0 %v45
    %95 = vmatprep.subr.mxu0 0.0
    %96 = vmatpush2.msra.mxu0 0.0
    %97 = vmatprep.subr.mxu0 0.0
    %98 = vmatpush2.msra.mxu0 0.0
    %99 = vmatprep.subr.mxu0 0.0
    %100 = vmatpush2.msra.mxu0 0.0
    %101 = vmatprep.subr.mxu0 0.0
    %102 = vmatpush2.msra.mxu0 0.0
    %103 = vmatprep.subr.mxu0 0.0
    %104 = vmatpush2.msra.mxu0 0.0
    %105 = vmatprep.subr.mxu0 0.0
    %106 = vmatpush2.msra.mxu0 0.0
    %107 = vmatprep.subr.mxu0 0.0
    %108 = vmatpush2.msra.mxu0 0.0
    %109 = vmatprep.subr.mxu0 0.0
    %110 = vmatpush2.msra.mxu0 0.0
    %111 = vmatprep.subr.mxu0 0.0
    %112 = vmatpush2.msra.mxu0 0.0
    %113 = vmatprep.subr.mxu0 0.0
    %114 = vmatpush2.msra.mxu0 0.0
    %115 = vmatprep.subr.mxu0 0.0
    %116 = vmatpush2.msra.mxu0 0.0
    %117 = vmatprep.subr.mxu0 0.0
    %118 = vmatpush2.msra.mxu0 0.0
    %119 = vmatprep.subr.mxu0 0.0
    %120 = vmatpush2.msra.mxu0 0.0
    %121 = vmatprep.subr.mxu0 0.0
    %122 = vmatpush2.msra.mxu0 0.0
    %123 = vmatprep.subr.mxu0 0.0
    %124 = vmatpush2.msra.mxu0 0.0
    %125 = vmatprep.subr.mxu0 0.0
    %126 = vmatpush2.msra.mxu0 0.0
    %127 = vmatprep.mubr.f32.mxu0 0.0
    %128 = vmatmul.mubr.f32.gmra.mxu0 %v58
    %v129 = vpop.f32.mrf.mxu0
    %v130 = vadd.f32 %v54, %v129
    %v131 = vpop.f32.mrf.mxu0
    %132 = vmatprep.mubr.f32.mxu0 0.0
    %133 = vmatmul.mubr.f32.gmra.mxu0 %v61
    %v134 = vpop.f32.mrf.mxu0
    %v135 = vadd.f32 %v54, %v134
    %v136 = vpop.f32.mrf.mxu0
    %137 = vdwg.mxu0
    %v138 = vmax.f32 %v130, 0.0
    %v139 = vmax.f32 %v135, 0.0
    %vm140 = vcmask 523264
    %141 = vst.msk [vmem:[#allocation7] sm:$0xff] %vm140, %v138
    %142 = vst.msk [vmem:[#allocation7 + $0x8] sm:$0xff] %vm140, %v139
    // Predicated region
    $region22: #{predictor_forward.1} parent=1 // pred_check
      _
    $region23: #{predictor_forward.1} parent=1 // pred_check_branch
      %144 = sbr.rel (0) target = $region25
    $region24: #{predictor_forward.1} parent=1 // pred_region
      %s146 = ssub.s32 256, 256
      %147 = vsyncadd [#allocation4], %s146
      %s148 = sshll.u32 [#allocation7], 4
      %s149 = int_to_ptr.vmem [resolvable:$true] %s148
      %154 = dma.vmem_to_hbm [thread:$0]  %s149, 256, %s3, [#allocation4], 128, 128, 8
    $region25: #{predictor_forward.1} parent=1 // pred_fallthru
      _
    // Predicated region
    $region26: #{predictor_forward.1} parent=1 // pred_check
      _
    $region27: #{predictor_forward.1} parent=1 // pred_check_branch
      %156 = sbr.rel (0) target = $region29
    $region28: #{predictor_forward.1} parent=1 // pred_region
      %157 = dma.done [#allocation4], 256
    $region29: #{predictor_forward.1} parent=1 // pred_fallthru
      _
    %158 = vsyncpa [#allocation3], 1
    %159 = vsyncpa [#allocation6], 1
    %160 = vsyncpa [#allocation4], 1

</llo_original>
